<compile_context>
chip_gen: v6e
topology: v6e:2x2x1
jax: 0.10.0
libtpu: 0.0.40
codegen_flags: <defaults>
</compile_context>

<pallas_src>
import math

import jax
import jax.numpy as jnp
from jax import lax
from jax.experimental import pallas as pl
from jax.experimental.pallas import tpu as pltpu


def _gelu_exact(x):
    # torch.nn.GELU() default = exact erf formulation
    return 0.5 * x * (1.0 + lax.erf(x / jnp.sqrt(jnp.float32(2.0))))


def moe_ffn_kernel(fetch_ref,            # SMEM (n_tiles*NE,) int32 (scalar prefetch)
                   x_ref,                # VMEM (tt, H)       bf16
                   wup_ref,              # VMEM (1, H, ti)    bf16
                   bup_ref,              # VMEM (1, 1, ti)    f32
                   wdn_ref,              # VMEM (1, ti, H)    bf16
                   bdn_ref,              # VMEM (1, 1, H)     f32
                   wtok_ref,             # VMEM (1, tt, NE)   f32 (resident per tile)
                   o_ref):               # VMEM (tt, H)       f32 (accumulator + output)
    i = pl.program_id(0)                 # token tile
    e = pl.program_id(1)                 # expert slot (0 = shared)
    k = pl.program_id(2)                 # intermediate-dim tile
    ne = pl.num_programs(1)
    nk = pl.num_programs(2)

    @pl.when(jnp.logical_and(e == 0, k == 0))
    def _():
        o_ref[...] = jnp.zeros_like(o_ref)

    # fetch[i*NE + e] == e  <=>  expert e has a routed token in tile i
    # (the shared expert, e == 0, is always active).  Inactive pairs skip all
    # compute, and their weight index_maps already skipped the DMA.
    @pl.when(fetch_ref[i * ne + e] == e)
    def _():
        x = x_ref[...]                                                # (tt, H) bf16
        h = jnp.dot(x, wup_ref[0],
                    preferred_element_type=jnp.float32) + bup_ref[0]  # (tt, ti) f32
        h = _gelu_exact(h)
        y = jnp.dot(h.astype(jnp.bfloat16), wdn_ref[0],
                    preferred_element_type=jnp.float32)               # (tt, H) f32

        # per-token weight of expert e: masked lane-reduce of the resident
        # (tt, NE) token-weight block (NE is tiny; VPU mul + XLU reduce).
        ne_lanes = wtok_ref.shape[-1]
        sel = (lax.broadcasted_iota(jnp.int32, (1, ne_lanes), 1) == e)
        wt = jnp.sum(wtok_ref[0] * sel.astype(jnp.float32),
                     axis=-1, keepdims=True)                          # (tt, 1)

        # down-proj bias applied once per expert (first I-tile only)
        @pl.when(k == 0)
        def _():
            o_ref[...] += wt * (y + bdn_ref[0])

        @pl.when(k > 0)
        def _():
            o_ref[...] += wt * y

    @pl.when(jnp.logical_and(e == ne - 1, k == nk - 1))
    def _():
        out = 0.1 * o_ref[...]
        denom = jnp.max(jnp.abs(out), axis=-1, keepdims=True) + 1e-6
        # exact divide: runs once per token tile, so cost is negligible and
        # parity with the reference is tighter than approx reciprocal.
        o_ref[...] = out / denom


def init_params(key, hidden_dim, num_experts, expansion=4):
    inter = hidden_dim * expansion
    std = 0.02 / math.sqrt(hidden_dim)
    ne = num_experts + 1  # index 0 = shared expert
    k0, k1, k2 = jax.random.split(key, 3)
    return dict(
        # Expert weights stored bf16: MXU-native dtype, halves weight HBM
        # streaming (the kernel's dominant DMA).
        wup=(std * jax.random.normal(k0, (ne, hidden_dim, inter), jnp.float32)
             ).astype(jnp.bfloat16),
        bup=jnp.zeros((ne, 1, inter), jnp.float32),
        wdn=(std * jax.random.normal(k1, (ne, inter, hidden_dim), jnp.float32)
             ).astype(jnp.bfloat16),
        bdn=jnp.zeros((ne, 1, hidden_dim), jnp.float32),
        gate_w=std * jax.random.normal(k2, (num_experts, hidden_dim), jnp.float32),
        gate_bias=jnp.zeros((num_experts,), jnp.float32),  # load-balance bias (zeros)
    )


# ------------------------- tile / VMEM heuristics -------------------------

def _round_up(x, m):
    return ((x + m - 1) // m) * m


def _chip_caps():
    """Returns (token_tile_cap, intermediate_tile_alignment, vmem_limit_bytes)."""
    kind = ""
    try:
        kind = jax.devices()[0].device_kind.lower()
    except Exception:
        pass
    try:
        vmem_cap = int(pltpu.get_tpu_info().vmem_capacity_bytes)
    except Exception:
        vmem_cap = 128 * 1024 * 1024
    vmem_limit = int(min(110 * 1024 * 1024, vmem_cap * 0.85))
    small_vmem = vmem_cap <= 64 * 1024 * 1024
    if "v7" in kind or small_vmem:
        # v7x: 64 MiB VMEM, 256-wide MXU, ~3.2 TB/s HBM -> tt~256 is enough.
        return 256, 256, vmem_limit
    if "v5e" in kind or "v5 lite" in kind or "v5lite" in kind:
        # v5e: MXU-bound already at tt~240; smaller tiles raise the
        # (tile, expert) skip hit-rate and keep VMEM pressure low.
        return 256, 128, vmem_limit
    # v6e (and default): 128 MiB VMEM; needs tt >~ 700 to be MXU-bound.
    return 1024, 256, vmem_limit


def _vmem_need_bytes(tt, ti, H, NE):
    need = 2 * tt * H * 2                         # x tile (bf16), double-buffered
    need += 2 * 2 * H * ti * 2                    # up + down weight blocks (bf16), 2-buf
    need += 2 * (ti + H) * 4                      # up / down bias blocks (f32), 2-buf
    need += 2 * tt * _round_up(NE, 128) * 4       # token-weight block (f32, lane-padded)
    need += 2 * tt * H * 4                        # resident f32 output/accumulator block
    need += tt * ti * (4 + 2)                     # GELU intermediate (f32) + bf16 copy
    need += tt * H * 4                            # down-proj f32 temp
    return need


def _pick_tiles(T, H, I, NE, tt_cap, ti_align, budget):
    tt_opts = [c for c in (1024, 512, 256, 128, 64, 32, 16, 8)
               if c <= min(tt_cap, T) and T % c == 0]
    if not tt_opts:
        tt_opts = [T]                   # tiny / odd T: full-extent block is legal
    # prefer >= 2 token tiles (megacore parallel axis), then larger tiles
    tt_opts.sort(key=lambda c: (0 if T // c >= 2 else 1, -c))

    ti_opts = sorted({c for c in (8192, 4096, 2048, 1024, 512, 256, 128)
                      if c <= I and I % c == 0}, reverse=True)
    if not ti_opts:
        ti_opts = [I]
    # prefer MXU-width-aligned intermediate tiles, then larger ones
    ti_opts.sort(key=lambda c: (0 if (c % ti_align == 0 or c == I) else 1, -c))

    for tt in tt_opts:
        for ti in ti_opts:
            if _vmem_need_bytes(tt, ti, H, NE) <= budget:
                return tt, ti
    return min(tt_opts), min(ti_opts)


# ------------------------------- forward ----------------------------------

def deepseek_moe_forward(x, params, top_k, *, token_tile=None, inter_tile=None):
    B, S, H = x.shape
    T = B * S
    x_flat = x.reshape(T, H).astype(jnp.float32)

    gate_w = params["gate_w"].astype(jnp.float32)    # (E, H)
    gate_bias = params["gate_bias"]                  # (E,)
    E = gate_w.shape[0]

    # ---- gating (tiny; plain JAX, kept in f32) ----
    scores = jax.nn.sigmoid(x_flat @ gate_w.T + gate_bias)          # (T, E)
    top_scores, top_idx = jax.lax.top_k(scores, top_k)
    top_scores = top_scores / (jnp.sum(top_scores, -1, keepdims=True) + 1e-6)
    dense_w = jnp.zeros((T, E), jnp.float32).at[
        jnp.arange(T)[:, None], top_idx].add(top_scores)            # (T, E)
    # TODO(synk): bias.data / expert_load running-state updates are training-time
    # side effects that do not influence this forward output; not reproduced here.

    # per-token weight for each expert; column 0 = shared expert (weight 1.0)
    wtok = jnp.concatenate([jnp.ones((T, 1), jnp.float32), dense_w], axis=1)  # (T, NE)
    NE = E + 1

    wup, bup = params["wup"], params["bup"]     # (NE, H, I) bf16, (NE, 1, I) f32
    wdn, bdn = params["wdn"], params["bdn"]     # (NE, I, H) bf16, (NE, 1, H) f32
    I = wup.shape[-1]

    tt_cap, ti_align, vmem_limit = _chip_caps()
    budget = int(vmem_limit * 0.75)
    auto_tt, auto_ti = _pick_tiles(T, H, I, NE, tt_cap, ti_align, budget)
    tt = token_tile or auto_tt
    ti = inter_tile or auto_ti
    assert T % tt == 0 and (tt % 8 == 0 or tt == T)
    assert I % ti == 0
    n_tiles = T // tt
    NK = I // ti

    # ---- scalar-prefetched fetch table (flattened 1-D -> no SMEM padding blowup)
    # fetch[i, e] = e when expert e is active in token tile i, else the index of
    # the last active expert < e (expert 0, the shared expert, is always active).
    # Index maps return (fetch[i,e], frozen k) for inactive pairs so Pallas
    # re-uses the already-resident weight block and issues NO new DMA.
    act = (wtok.reshape(n_tiles, tt, NE) > 0.0).any(axis=1)             # (n_tiles, NE)
    e_ids = jnp.arange(NE, dtype=jnp.int32)[None, :]
    fetch = lax.cummax(jnp.where(act, e_ids, -1).astype(jnp.int32), axis=1)
    fetch_flat = fetch.reshape(-1).astype(jnp.int32)                    # (n_tiles*NE,)

    # per-token expert weights, one resident block per token tile
    wtok3 = wtok.reshape(n_tiles, tt, NE)

    x_bf = x_flat.astype(jnp.bfloat16)

    def _resolve(i, e, k, fetch_ref):
        idx = i * NE + e
        fe = fetch_ref[idx]
        a = (fe == e).astype(jnp.int32)          # 1 iff expert e active in tile i
        kk = a * k + (1 - a) * (NK - 1)          # freeze k for inactive experts
        return fe, kk

    def x_map(i, e, k, fetch_ref):
        return (i, 0)

    def wup_map(i, e, k, fetch_ref):
        fe, kk = _resolve(i, e, k, fetch_ref)
        return (fe, 0, kk)

    def bup_map(i, e, k, fetch_ref):
        fe, kk = _resolve(i, e, k, fetch_ref)
        return (fe, 0, kk)

    def wdn_map(i, e, k, fetch_ref):
        fe, kk = _resolve(i, e, k, fetch_ref)
        return (fe, kk, 0)

    def bdn_map(i, e, k, fetch_ref):
        fe, _ = _resolve(i, e, k, fetch_ref)
        return (fe, 0, 0)

    def wtok_map(i, e, k, fetch_ref):
        return (i, 0, 0)

    def out_map(i, e, k, fetch_ref):
        return (i, 0)

    grid = (n_tiles, NE, NK)

    out_flat = pl.pallas_call(
        moe_ffn_kernel,
        out_shape=jax.ShapeDtypeStruct((T, H), jnp.float32),
        grid_spec=pltpu.PrefetchScalarGridSpec(
            num_scalar_prefetch=1,
            grid=grid,
            in_specs=[
                pl.BlockSpec((tt, H), x_map),         # x tile (bf16)
                pl.BlockSpec((1, H, ti), wup_map),    # up weight (bf16)
                pl.BlockSpec((1, 1, ti), bup_map),    # up bias (f32)
                pl.BlockSpec((1, ti, H), wdn_map),    # down weight (bf16)
                pl.BlockSpec((1, 1, H), bdn_map),     # down bias (f32)
                pl.BlockSpec((1, tt, NE), wtok_map),  # per-token expert weights (f32)
            ],
            out_specs=pl.BlockSpec((tt, H), out_map),
            scratch_shapes=[],
        ),
        compiler_params=pltpu.CompilerParams(
            dimension_semantics=("parallel", "arbitrary", "arbitrary"),
            vmem_limit_bytes=vmem_limit),
    )(fetch_flat, x_bf, wup, bup, wdn, bdn, wtok3)

    return out_flat.reshape(B, S, H).astype(x.dtype)


# ------------------------------ reference ---------------------------------

def reference_forward(x, params, top_k):
    """Pure-JAX f32 reference matching the PyTorch forward semantics."""
    B, S, H = x.shape
    T = B * S
    x_flat = x.reshape(T, H).astype(jnp.float32)
    gate_w = params["gate_w"].astype(jnp.float32)
    gate_bias = params["gate_bias"]
    E = gate_w.shape[0]

    scores = jax.nn.sigmoid(x_flat @ gate_w.T + gate_bias)
    top_scores, top_idx = jax.lax.top_k(scores, top_k)
    top_scores = top_scores / (jnp.sum(top_scores, -1, keepdims=True) + 1e-6)
    dense_w = jnp.zeros((T, E), jnp.float32).at[
        jnp.arange(T)[:, None], top_idx].add(top_scores)

    wup = params["wup"].astype(jnp.float32)
    wdn = params["wdn"].astype(jnp.float32)
    bup, bdn = params["bup"], params["bdn"]

    def ffn(xf, wu, bu, wd, bd):
        return _gelu_exact(xf @ wu + bu) @ wd + bd

    shared = ffn(x_flat, wup[0], bup[0], wdn[0], bdn[0]) * 0.1
    combined = jnp.zeros_like(x_flat)
    for e in range(E):
        yo = ffn(x_flat, wup[e + 1], bup[e + 1], wdn[e + 1], bdn[e + 1]) * 0.1
        combined = combined + dense_w[:, e:e + 1] * yo
    moe = shared + combined
    moe = moe / (jnp.max(jnp.abs(moe), axis=-1, keepdims=True) + 1e-6)
    return moe.reshape(B, S, H).astype(x.dtype)


if __name__ == "__main__":
    # Small shapes; E=16 routed experts so some (token-tile, expert) pairs are
    # inactive and the DMA-skip / compute-skip path is actually exercised.
    B, S, H, E, K = 2, 8, 64, 16, 2
    key = jax.random.PRNGKey(0)
    kx, kp = jax.random.split(key)
    x = jax.random.normal(kx, (B, S, H), dtype=jnp.float32)
    params = init_params(kp, H, E)

    out = deepseek_moe_forward(x, params, K)
    out = jax.block_until_ready(out)

    ref = reference_forward(x, params, K)
    assert out.shape == (B, S, H)
    # Tolerance accounts for bf16 matmuls with f32 accumulation.
    if not jnp.allclose(out, ref, atol=2e-2, rtol=2e-2):
        err = float(jnp.max(jnp.abs(out - ref)))
        raise AssertionError(f"Pallas MoE output mismatch (max abs err {err:.3e})")
    print("KERNEL_OK")
</pallas_src>

<mosaic_0001>
module attributes {stable_mosaic.version = 11 : i64} {
  func.func @moe_ffn_kernel(%arg0: i32, %arg1: i32, %arg2: i32, %arg3: memref<34xi32, #tpu.memory_space<smem>>, %arg4: memref<8x64xbf16, #tpu.memory_space<vmem>>, %arg5: memref<1x64x256xbf16, #tpu.memory_space<vmem>>, %arg6: memref<1x1x256xf32, #tpu.memory_space<vmem>>, %arg7: memref<1x256x64xbf16, #tpu.memory_space<vmem>>, %arg8: memref<1x1x64xf32, #tpu.memory_space<vmem>>, %arg9: memref<1x8x17xf32, #tpu.memory_space<vmem>>, %arg10: memref<8x64xf32, #tpu.memory_space<vmem>>) attributes {dimension_semantics = [#tpu.dimension_semantics<parallel>, #tpu.dimension_semantics<arbitrary>, #tpu.dimension_semantics<arbitrary>], iteration_bounds = array<i64: 2, 17, 1>, scalar_prefetch = 1 : i64, scratch_operands = 0 : i64, tpu.core_type = #tpu.core_type<tc>, window_params = [{transform_indices = @transform_0, window_bounds = array<i64: 8, 64>}, {transform_indices = @transform_1, window_bounds = array<i64: 1, 64, 256>}, {transform_indices = @transform_2, window_bounds = array<i64: 1, 1, 256>}, {transform_indices = @transform_3, window_bounds = array<i64: 1, 256, 64>}, {transform_indices = @transform_4, window_bounds = array<i64: 1, 1, 64>}, {transform_indices = @transform_5, window_bounds = array<i64: 1, 8, 17>}, {transform_indices = @transform_6, window_bounds = array<i64: 8, 64>}]} {
    %c0_i32 = arith.constant 0 : i32
    %0 = arith.cmpi eq, %arg1, %c0_i32 : i32
    %c0_i32_0 = arith.constant 0 : i32
    %1 = arith.cmpi eq, %arg2, %c0_i32_0 : i32
    %2 = arith.andi %0, %1 : i1
    %3 = arith.extui %2 : i1 to i32
    %c0_i32_1 = arith.constant 0 : i32
    %4 = arith.cmpi ne, %3, %c0_i32_1 : i32
    scf.if %4 {
      %cst = arith.constant 0.000000e+00 : f32
      %17 = vector.broadcast %cst : f32 to vector<8x64xf32>
      %c0 = arith.constant 0 : index
      %c0_5 = arith.constant 0 : index
      %18 = vector.load %arg10[%c0, %c0_5] : memref<8x64xf32, #tpu.memory_space<vmem>>, vector<8x64xf32>
      tpu.vector_store %arg10[%c0, %c0_5], %17 {strides = array<i32>} : memref<8x64xf32, #tpu.memory_space<vmem>>, vector<8x64xf32>,
    } else {
    }
    %c17_i32 = arith.constant 17 : i32
    %5 = arith.muli %arg0, %c17_i32 : i32
    %6 = arith.addi %5, %arg1 : i32
    %7 = arith.index_cast %6 : i32 to index
    %8 = memref.load %arg3[%7] : memref<34xi32, #tpu.memory_space<smem>>
    %9 = arith.cmpi eq, %8, %arg1 : i32
    %10 = arith.extui %9 : i1 to i32
    %c0_i32_2 = arith.constant 0 : i32
    %11 = arith.cmpi ne, %10, %c0_i32_2 : i32
    scf.if %11 {
      %c0 = arith.constant 0 : index
      %c0_5 = arith.constant 0 : index
      %17 = vector.load %arg4[%c0, %c0_5] : memref<8x64xbf16, #tpu.memory_space<vmem>>, vector<8x64xbf16>
      %c0_6 = arith.constant 0 : index
      %c0_7 = arith.constant 0 : index
      %c0_8 = arith.constant 0 : index
      %18 = vector.load %arg5[%c0_6, %c0_7, %c0_8] : memref<1x64x256xbf16, #tpu.memory_space<vmem>>, vector<1x64x256xbf16>
      %19 = vector.shape_cast %18 : vector<1x64x256xbf16> to vector<64x256xbf16>
      %cst = arith.constant dense<0.000000e+00> : vector<8x256xf32>
      %20 = tpu.matmul %17, %19, %cst {dimension_numbers = #tpu.dot_dimension_numbers<[1], [0], [0], [1], [0, 0, 1, 1], [], []>} : vector<8x64xbf16>, vector<64x256xbf16>, vector<8x256xf32> -> vector<8x256xf32>
      %c0_9 = arith.constant 0 : index
      %c0_10 = arith.constant 0 : index
      %c0_11 = arith.constant 0 : index
      %21 = vector.load %arg6[%c0_9, %c0_10, %c0_11] : memref<1x1x256xf32, #tpu.memory_space<vmem>>, vector<1x1x256xf32>
      %22 = vector.shape_cast %21 : vector<1x1x256xf32> to vector<1x256xf32>
      %23 = vector.broadcast %22 : vector<1x256xf32> to vector<8x256xf32>
      %24 = arith.addf %20, %23 : vector<8x256xf32>
      %cst_12 = arith.constant 5.000000e-01 : f32
      %25 = vector.broadcast %cst_12 : f32 to vector<8x256xf32>
      %26 = arith.mulf %25, %24 : vector<8x256xf32>
      %cst_13 = arith.constant 2.000000e+00 : f32
      %27 = math.sqrt %cst_13 : f32
      %28 = vector.broadcast %27 : f32 to vector<8x256xf32>
      %29 = arith.divf %24, %28 : vector<8x256xf32>
      %30 = math.erf %29 : vector<8x256xf32>
      %cst_14 = arith.constant 1.000000e+00 : f32
      %31 = vector.broadcast %cst_14 : f32 to vector<8x256xf32>
      %32 = arith.addf %31, %30 : vector<8x256xf32>
      %33 = arith.mulf %26, %32 : vector<8x256xf32>
      %34 = arith.truncf %33 : vector<8x256xf32> to vector<8x256xbf16>
      %c0_15 = arith.constant 0 : index
      %c0_16 = arith.constant 0 : index
      %c0_17 = arith.constant 0 : index
      %35 = vector.load %arg7[%c0_15, %c0_16, %c0_17] : memref<1x256x64xbf16, #tpu.memory_space<vmem>>, vector<1x256x64xbf16>
      %36 = vector.shape_cast %35 : vector<1x256x64xbf16> to vector<256x64xbf16>
      %cst_18 = arith.constant dense<0.000000e+00> : vector<8x64xf32>
      %37 = tpu.matmul %34, %36, %cst_18 {dimension_numbers = #tpu.dot_dimension_numbers<[1], [0], [0], [1], [0, 0, 1, 1], [], []>} : vector<8x256xbf16>, vector<256x64xbf16>, vector<8x64xf32> -> vector<8x64xf32>
      %38 = tpu.iota {dimensions = array<i32: 1>} : vector<1x17xi32>
      %39 = vector.broadcast %arg1 : i32 to vector<1x17xi32>
      %40 = arith.cmpi eq, %38, %39 : vector<1x17xi32>
      %c0_19 = arith.constant 0 : index
      %c0_20 = arith.constant 0 : index
      %c0_21 = arith.constant 0 : index
      %41 = vector.load %arg9[%c0_19, %c0_20, %c0_21] : memref<1x8x17xf32, #tpu.memory_space<vmem>>, vector<1x8x17xf32>
      %42 = vector.shape_cast %41 : vector<1x8x17xf32> to vector<8x17xf32>
      %43 = arith.extui %40 : vector<1x17xi1> to vector<1x17xi32>
      %44 = arith.sitofp %43 : vector<1x17xi32> to vector<1x17xf32>
      %45 = vector.broadcast %44 : vector<1x17xf32> to vector<8x17xf32>
      %46 = arith.mulf %42, %45 : vector<8x17xf32>
      %cst_22 = arith.constant dense<0.000000e+00> : vector<8xf32>
      %47 = vector.multi_reduction <add>, %46, %cst_22 [1] : vector<8x17xf32> to vector<8xf32>
      %48 = vector.shape_cast %47 : vector<8xf32> to vector<8x1xf32>
      %c0_i32_23 = arith.constant 0 : i32
      %49 = arith.cmpi eq, %arg2, %c0_i32_23 : i32
      %50 = arith.extui %49 : i1 to i32
      %c0_i32_24 = arith.constant 0 : i32
      %51 = arith.cmpi ne, %50, %c0_i32_24 : i32
      scf.if %51 {
        %c0_27 = arith.constant 0 : index
        %c0_28 = arith.constant 0 : index
        %55 = vector.load %arg10[%c0_27, %c0_28] : memref<8x64xf32, #tpu.memory_space<vmem>>, vector<8x64xf32>
        %c0_29 = arith.constant 0 : index
        %c0_30 = arith.constant 0 : index
        %c0_31 = arith.constant 0 : index
        %56 = vector.load %arg8[%c0_29, %c0_30, %c0_31] : memref<1x1x64xf32, #tpu.memory_space<vmem>>, vector<1x1x64xf32>
        %57 = vector.shape_cast %56 : vector<1x1x64xf32> to vector<1x64xf32>
        %58 = vector.broadcast %57 : vector<1x64xf32> to vector<8x64xf32>
        %59 = arith.addf %37, %58 : vector<8x64xf32>
        %60 = vector.broadcast %48 : vector<8x1xf32> to vector<8x64xf32>
        %61 = arith.mulf %60, %59 : vector<8x64xf32>
        %62 = arith.addf %55, %61 : vector<8x64xf32>
        %c0_32 = arith.constant 0 : index
        %c0_33 = arith.constant 0 : index
        %63 = vector.load %arg10[%c0_32, %c0_33] : memref<8x64xf32, #tpu.memory_space<vmem>>, vector<8x64xf32>
        tpu.vector_store %arg10[%c0_32, %c0_33], %62 {strides = array<i32>} : memref<8x64xf32, #tpu.memory_space<vmem>>, vector<8x64xf32>,
      } else {
      }
      %c0_i32_25 = arith.constant 0 : i32
      %52 = arith.cmpi sgt, %arg2, %c0_i32_25 : i32
      %53 = arith.extui %52 : i1 to i32
      %c0_i32_26 = arith.constant 0 : i32
      %54 = arith.cmpi ne, %53, %c0_i32_26 : i32
      scf.if %54 {
        %c0_27 = arith.constant 0 : index
        %c0_28 = arith.constant 0 : index
        %55 = vector.load %arg10[%c0_27, %c0_28] : memref<8x64xf32, #tpu.memory_space<vmem>>, vector<8x64xf32>
        %56 = vector.broadcast %48 : vector<8x1xf32> to vector<8x64xf32>
        %57 = arith.mulf %56, %37 : vector<8x64xf32>
        %58 = arith.addf %55, %57 : vector<8x64xf32>
        %c0_29 = arith.constant 0 : index
        %c0_30 = arith.constant 0 : index
        %59 = vector.load %arg10[%c0_29, %c0_30] : memref<8x64xf32, #tpu.memory_space<vmem>>, vector<8x64xf32>
        tpu.vector_store %arg10[%c0_29, %c0_30], %58 {strides = array<i32>} : memref<8x64xf32, #tpu.memory_space<vmem>>, vector<8x64xf32>,
      } else {
      }
    } else {
    }
    %c16_i32 = arith.constant 16 : i32
    %12 = arith.cmpi eq, %arg1, %c16_i32 : i32
    %c0_i32_3 = arith.constant 0 : i32
    %13 = arith.cmpi eq, %arg2, %c0_i32_3 : i32
    %14 = arith.andi %12, %13 : i1
    %15 = arith.extui %14 : i1 to i32
    %c0_i32_4 = arith.constant 0 : i32
    %16 = arith.cmpi ne, %15, %c0_i32_4 : i32
    scf.if %16 {
      %c0 = arith.constant 0 : index
      %c0_5 = arith.constant 0 : index
      %17 = vector.load %arg10[%c0, %c0_5] : memref<8x64xf32, #tpu.memory_space<vmem>>, vector<8x64xf32>
      %cst = arith.constant 1.000000e-01 : f32
      %18 = vector.broadcast %cst : f32 to vector<8x64xf32>
      %19 = arith.mulf %18, %17 : vector<8x64xf32>
      %20 = math.absf %19 : vector<8x64xf32>
      %cst_6 = arith.constant dense<0xFF800000> : vector<8xf32>
      %21 = vector.multi_reduction <maximumf>, %20, %cst_6 [1] : vector<8x64xf32> to vector<8xf32>
      %22 = vector.shape_cast %21 : vector<8xf32> to vector<8x1xf32>
      %cst_7 = arith.constant 9.99999997E-7 : f32
      %23 = vector.broadcast %cst_7 : f32 to vector<8x1xf32>
      %24 = arith.addf %22, %23 : vector<8x1xf32>
      %25 = vector.broadcast %24 : vector<8x1xf32> to vector<8x64xf32>
      %26 = arith.divf %19, %25 : vector<8x64xf32>
      %c0_8 = arith.constant 0 : index
      %c0_9 = arith.constant 0 : index
      %27 = vector.load %arg10[%c0_8, %c0_9] : memref<8x64xf32, #tpu.memory_space<vmem>>, vector<8x64xf32>
      tpu.vector_store %arg10[%c0_8, %c0_9], %26 {strides = array<i32>} : memref<8x64xf32, #tpu.memory_space<vmem>>, vector<8x64xf32>,
    } else {
    }
    return
  }
  func.func @transform_0(%arg0: i32, %arg1: i32, %arg2: i32, %arg3: memref<34xi32, #tpu.memory_space<smem>>) -> (i32, i32) {
    %c0_i32 = arith.constant 0 : i32
    %c0_i32_0 = arith.constant 0 : i32
    return %arg0, %c0_i32 : i32, i32
  }
  func.func @transform_1(%arg0: i32, %arg1: i32, %arg2: i32, %arg3: memref<34xi32, #tpu.memory_space<smem>>) -> (i32, i32, i32) {
    %c17_i32 = arith.constant 17 : i32
    %0 = arith.muli %arg0, %c17_i32 : i32
    %1 = arith.addi %0, %arg1 : i32
    %2 = arith.index_cast %1 : i32 to index
    %3 = memref.load %arg3[%2] : memref<34xi32, #tpu.memory_space<smem>>
    %4 = arith.cmpi eq, %3, %arg1 : i32
    %5 = arith.extui %4 : i1 to i32
    %6 = arith.muli %5, %arg2 : i32
    %c1_i32 = arith.constant 1 : i32
    %7 = arith.subi %c1_i32, %5 : i32
    %c0_i32 = arith.constant 0 : i32
    %8 = arith.muli %7, %c0_i32 : i32
    %9 = arith.addi %6, %8 : i32
    %c0_i32_0 = arith.constant 0 : i32
    %c0_i32_1 = arith.constant 0 : i32
    return %3, %c0_i32_0, %9 : i32, i32, i32
  }
  func.func @transform_2(%arg0: i32, %arg1: i32, %arg2: i32, %arg3: memref<34xi32, #tpu.memory_space<smem>>) -> (i32, i32, i32) {
    %c17_i32 = arith.constant 17 : i32
    %0 = arith.muli %arg0, %c17_i32 : i32
    %1 = arith.addi %0, %arg1 : i32
    %2 = arith.index_cast %1 : i32 to index
    %3 = memref.load %arg3[%2] : memref<34xi32, #tpu.memory_space<smem>>
    %4 = arith.cmpi eq, %3, %arg1 : i32
    %5 = arith.extui %4 : i1 to i32
    %6 = arith.muli %5, %arg2 : i32
    %c1_i32 = arith.constant 1 : i32
    %7 = arith.subi %c1_i32, %5 : i32
    %c0_i32 = arith.constant 0 : i32
    %8 = arith.muli %7, %c0_i32 : i32
    %9 = arith.addi %6, %8 : i32
    %c0_i32_0 = arith.constant 0 : i32
    %c0_i32_1 = arith.constant 0 : i32
    return %3, %c0_i32_0, %9 : i32, i32, i32
  }
  func.func @transform_3(%arg0: i32, %arg1: i32, %arg2: i32, %arg3: memref<34xi32, #tpu.memory_space<smem>>) -> (i32, i32, i32) {
    %c17_i32 = arith.constant 17 : i32
    %0 = arith.muli %arg0, %c17_i32 : i32
    %1 = arith.addi %0, %arg1 : i32
    %2 = arith.index_cast %1 : i32 to index
    %3 = memref.load %arg3[%2] : memref<34xi32, #tpu.memory_space<smem>>
    %4 = arith.cmpi eq, %3, %arg1 : i32
    %5 = arith.extui %4 : i1 to i32
    %6 = arith.muli %5, %arg2 : i32
    %c1_i32 = arith.constant 1 : i32
    %7 = arith.subi %c1_i32, %5 : i32
    %c0_i32 = arith.constant 0 : i32
    %8 = arith.muli %7, %c0_i32 : i32
    %9 = arith.addi %6, %8 : i32
    %c0_i32_0 = arith.constant 0 : i32
    %c0_i32_1 = arith.constant 0 : i32
    return %3, %9, %c0_i32_0 : i32, i32, i32
  }
  func.func @transform_4(%arg0: i32, %arg1: i32, %arg2: i32, %arg3: memref<34xi32, #tpu.memory_space<smem>>) -> (i32, i32, i32) {
    %c17_i32 = arith.constant 17 : i32
    %0 = arith.muli %arg0, %c17_i32 : i32
    %1 = arith.addi %0, %arg1 : i32
    %2 = arith.index_cast %1 : i32 to index
    %3 = memref.load %arg3[%2] : memref<34xi32, #tpu.memory_space<smem>>
    %4 = arith.cmpi eq, %3, %arg1 : i32
    %5 = arith.extui %4 : i1 to i32
    %6 = arith.muli %5, %arg2 : i32
    %c1_i32 = arith.constant 1 : i32
    %7 = arith.subi %c1_i32, %5 : i32
    %c0_i32 = arith.constant 0 : i32
    %8 = arith.muli %7, %c0_i32 : i32
    %9 = arith.addi %6, %8 : i32
    %c0_i32_0 = arith.constant 0 : i32
    %c0_i32_1 = arith.constant 0 : i32
    %c0_i32_2 = arith.constant 0 : i32
    return %3, %c0_i32_0, %c0_i32_1 : i32, i32, i32
  }
  func.func @transform_5(%arg0: i32, %arg1: i32, %arg2: i32, %arg3: memref<34xi32, #tpu.memory_space<smem>>) -> (i32, i32, i32) {
    %c0_i32 = arith.constant 0 : i32
    %c0_i32_0 = arith.constant 0 : i32
    %c0_i32_1 = arith.constant 0 : i32
    return %arg0, %c0_i32, %c0_i32_0 : i32, i32, i32
  }
  func.func @transform_6(%arg0: i32, %arg1: i32, %arg2: i32, %arg3: memref<34xi32, #tpu.memory_space<smem>>) -> (i32, i32) {
    %c0_i32 = arith.constant 0 : i32
    %c0_i32_0 = arith.constant 0 : i32
    return %arg0, %c0_i32 : i32, i32
  }
}

</mosaic_0001>

<llo_original>
// kernel: tpu_custom_call.1
$region0: #{tpu_custom_call.1}
  #allocation0 [shape = 'u32[]', space=smem, size = 0x4, offset = 0x4, fixed_abs, tag = 'smem constant byte address 0x4 - core index']
  #allocation1 [shape = 'u32[144,128]{1,0:T(1,128)}', space=vmem, size = 0x12000, scoped, tag = 'internal scratch']
  #allocation2 [shape = 's32[1]{0}', space=sflag, size = 0x4, scoped, tag = 'scoped memory for tpu_custom_call.1']
  #allocation3 [shape = 'u8[512]{0}', space=smem, size = 0x200, scoped, tag = 'prefetched SMEM operand 0']
  %s0 = inlined_call_operand.vmem [shape: s32[34], index: 0, kind: input, shape index: {}]
  %s1 = inlined_call_operand.vmem [shape: bf16[16,64], index: 1, kind: input, shape index: {}]
  %s2 = inlined_call_operand.vmem [shape: bf16[17,64,256], index: 2, kind: input, shape index: {}]
  %s3 = inlined_call_operand.vmem [shape: f32[17,1,256], index: 3, kind: input, shape index: {}]
  %s4 = inlined_call_operand.vmem [shape: bf16[17,256,64], index: 4, kind: input, shape index: {}]
  %s5 = inlined_call_operand.vmem [shape: f32[17,1,64], index: 5, kind: input, shape index: {}]
  %s6 = inlined_call_operand.vmem [shape: f32[2,8,17], index: 6, kind: input, shape index: {}]
  %s7 = inlined_call_operand.hbm [shape: f32[16,64], index: 7, kind: output, shape index: {}]
  %s8 = sld [smem:[#allocation0]]
  $region77: #{tpu_custom_call.1} parent=0
    _
  %s10 = ssub.s32 1, %s8
  %s11 = scalar_select 0, %s10, %s8
  %s12 = sshll.u32 %s0, 4
  %s13 = int_to_ptr.vmem [resolvable:$true] %s12
  %15 = dma.vmem_to_smem %s13, 16, [#allocation3], [#allocation2]
  %16 = dma.done [#allocation2], 16
  %17 = sfence
  $region1: #{tpu_custom_call.1} parent=0
    #allocation4 [shape = 'u8[8192]{0}', space=vmem, size = 0x2000, scoped, tag = 'output window, operand 0']
    #allocation5 [shape = 's32[2]{0}', space=sflag, size = 0x8, scoped, tag = 'scoped memory for tpu_custom_call.1']
    %18 = vsyncpa [#allocation5], 0
    %s19 = scalar_lea.sflag [#allocation5], 1
    %20 = vsyncpa %s19, 0
    loop: start=0, step=1, limit=36
    $region2: #{tpu_custom_call.1} parent=1 // loop_pre_header
      _
    $region3: #{tpu_custom_call.1} parent=1 // loop_header
      %s22 = sphi 0, %s26
      %p23 = scmp.ge.s32.totalorder %s22, 36
      %s29 = sphi 0, %s48
      %s30 = sphi 0, %s44
      %s31 = sphi 0, %s40
      %s32 = sphi 0, %s29
      %s33 = sphi 0, %s30
      %s34 = sphi 0, %s31
      %s35 = sphi 0, %s32
      %s36 = sphi 0, %s33
      %s37 = sphi 0, %s34
      %s51 = sphi 0, %s53
      %s54 = sphi 0, %s51
      %s55 = sphi 0, %s54
      %s71 = sphi 0, %s55
      %s91 = sphi 0, %s93
      %s94 = sphi 0, %s91
      %s95 = sphi 0, %s94
      %s111 = sphi 0, %s95
      %s131 = sphi 0, %s133
      %s134 = sphi 0, %s131
      %s135 = sphi 0, %s134
      %s151 = sphi 0, %s135
      %s171 = sphi 0, %s173
      %s174 = sphi 0, %s171
      %s175 = sphi 0, %s174
      %s191 = sphi 0, %s175
      %s203 = sphi 0, %s205
      %s206 = sphi 0, %s203
      %s207 = sphi 0, %s206
      %s223 = sphi 0, %s207
      %s229 = sphi 0, %s231
      %s232 = sphi 0, %s229
      %s233 = sphi 0, %s232
      %s249 = sphi 0, %s233
      %s255 = sphi 0, %s257
      %s258 = sphi 0, %s255
      %s259 = sphi 0, %s258
      %s275 = sphi 0, %s259
    $region4: #{tpu_custom_call.1} parent=1 // loop_header_branch
      %25 = sbr.rel (%p23) target = $region8
    $region5: #{tpu_custom_call.1} parent=1 // loop_body
      %s27 = ssub.s32 %s22, 1
      %s28 = ssub.s32 %s22, 2
      %s38 = sadd.s32 1, %s31
      %p39 = scmp.ge.s32.totalorder %s38, 1
      %s40 = scalar_select %p39, 0, %s38
      %s41 = sadd.s32 1, %s30
      %s42 = scalar_select %p39, %s41, %s30
      %p43 = scmp.ge.s32.totalorder %s42, 17
      %s44 = scalar_select %p43, 0, %s42
      %s45 = sadd.s32 1, %s29
      %s46 = scalar_select %p43, %s45, %s29
      %p47 = scmp.ge.s32.totalorder %s46, 2
      %s48 = scalar_select %p47, 0, %s46
      %s49 = ssub.s32 %s29, %s48
      %p50 = scmp.eq.s32.totalorder %s49, 0
      %s52 = sadd.s32 %s51, 1
      %s53 = scalar_select %p50, %s51, %s52
      %p56 = pneg %p50
      %p57 = scmp.eq.s32.totalorder %s22, 33
      %p58 = por %p56, %p57
      %p59 = scmp.ne.s32.totalorder %s51, %s54
      %p60 = scmp.eq.s32.totalorder %s22, 0
      %p61 = por %p59, %p60
      %p62 = scmp.ne.s32.totalorder %s51, %s54
      %p63 = scmp.eq.s32.totalorder %s27, 33
      %p64 = por %p62, %p63
      %p65 = scmp.ne.s32.totalorder %s54, %s55
      %p66 = scmp.eq.s32.totalorder %s27, 0
      %p67 = por %p65, %p66
      %p68 = scmp.ne.s32.totalorder %s54, %s55
      %p69 = scmp.eq.s32.totalorder %s28, 33
      %p70 = por %p68, %p69
      %p72 = scmp.ne.s32.totalorder %s55, %s71
      %p73 = scmp.eq.s32.totalorder %s28, 0
      %p74 = por %p72, %p73
      %s75 = smul.u32 %s29, 17
      %s76 = sadd.s32 %s75, %s30
      %s77 = sld [smem:[#allocation3 + %s76]]
      %p78 = scmp.eq.s32.totalorder %s77, %s30
      %s79 = scalar_select %p78, 1, 0
      %s80 = smul.u32 %s79, %s31
      %s81 = smul.u32 %s48, 17
      %s82 = sadd.s32 %s81, %s44
      %s83 = sld [smem:[#allocation3 + %s82]]
      %p84 = scmp.eq.s32.totalorder %s83, %s44
      %s85 = scalar_select %p84, 1, 0
      %s86 = smul.u32 %s85, %s40
      %s87 = ssub.s32 %s77, %s83
      %s88 = ssub.s32 %s80, %s86
      %s89 = sor.u32 %s87, %s88
      %p90 = scmp.eq.s32.totalorder %s89, 0
      %s92 = sadd.s32 %s91, 1
      %s93 = scalar_select %p90, %s91, %s92
      %p96 = pneg %p90
      %p97 = scmp.eq.s32.totalorder %s22, 33
      %p98 = por %p96, %p97
      %p99 = scmp.ne.s32.totalorder %s91, %s94
      %p100 = scmp.eq.s32.totalorder %s22, 0
      %p101 = por %p99, %p100
      %p102 = scmp.ne.s32.totalorder %s91, %s94
      %p103 = scmp.eq.s32.totalorder %s27, 33
      %p104 = por %p102, %p103
      %p105 = scmp.ne.s32.totalorder %s94, %s95
      %p106 = scmp.eq.s32.totalorder %s27, 0
      %p107 = por %p105, %p106
      %p108 = scmp.ne.s32.totalorder %s94, %s95
      %p109 = scmp.eq.s32.totalorder %s28, 33
      %p110 = por %p108, %p109
      %p112 = scmp.ne.s32.totalorder %s95, %s111
      %p113 = scmp.eq.s32.totalorder %s28, 0
      %p114 = por %p112, %p113
      %s115 = smul.u32 %s29, 17
      %s116 = sadd.s32 %s115, %s30
      %s117 = sld [smem:[#allocation3 + %s116]]
      %p118 = scmp.eq.s32.totalorder %s117, %s30
      %s119 = scalar_select %p118, 1, 0
      %s120 = smul.u32 %s119, %s31
      %s121 = smul.u32 %s48, 17
      %s122 = sadd.s32 %s121, %s44
      %s123 = sld [smem:[#allocation3 + %s122]]
      %p124 = scmp.eq.s32.totalorder %s123, %s44
      %s125 = scalar_select %p124, 1, 0
      %s126 = smul.u32 %s125, %s40
      %s127 = ssub.s32 %s117, %s123
      %s128 = ssub.s32 %s120, %s126
      %s129 = sor.u32 %s127, %s128
      %p130 = scmp.eq.s32.totalorder %s129, 0
      %s132 = sadd.s32 %s131, 1
      %s133 = scalar_select %p130, %s131, %s132
      %p136 = pneg %p130
      %p137 = scmp.eq.s32.totalorder %s22, 33
      %p138 = por %p136, %p137
      %p139 = scmp.ne.s32.totalorder %s131, %s134
      %p140 = scmp.eq.s32.totalorder %s22, 0
      %p141 = por %p139, %p140
      %p142 = scmp.ne.s32.totalorder %s131, %s134
      %p143 = scmp.eq.s32.totalorder %s27, 33
      %p144 = por %p142, %p143
      %p145 = scmp.ne.s32.totalorder %s134, %s135
      %p146 = scmp.eq.s32.totalorder %s27, 0
      %p147 = por %p145, %p146
      %p148 = scmp.ne.s32.totalorder %s134, %s135
      %p149 = scmp.eq.s32.totalorder %s28, 33
      %p150 = por %p148, %p149
      %p152 = scmp.ne.s32.totalorder %s135, %s151
      %p153 = scmp.eq.s32.totalorder %s28, 0
      %p154 = por %p152, %p153
      %s155 = smul.u32 %s29, 17
      %s156 = sadd.s32 %s155, %s30
      %s157 = sld [smem:[#allocation3 + %s156]]
      %p158 = scmp.eq.s32.totalorder %s157, %s30
      %s159 = scalar_select %p158, 1, 0
      %s160 = smul.u32 %s159, %s31
      %s161 = smul.u32 %s48, 17
      %s162 = sadd.s32 %s161, %s44
      %s163 = sld [smem:[#allocation3 + %s162]]
      %p164 = scmp.eq.s32.totalorder %s163, %s44
      %s165 = scalar_select %p164, 1, 0
      %s166 = smul.u32 %s165, %s40
      %s167 = ssub.s32 %s157, %s163
      %s168 = ssub.s32 %s160, %s166
      %s169 = sor.u32 %s167, %s168
      %p170 = scmp.eq.s32.totalorder %s169, 0
      %s172 = sadd.s32 %s171, 1
      %s173 = scalar_select %p170, %s171, %s172
      %p176 = pneg %p170
      %p177 = scmp.eq.s32.totalorder %s22, 33
      %p178 = por %p176, %p177
      %p179 = scmp.ne.s32.totalorder %s171, %s174
      %p180 = scmp.eq.s32.totalorder %s22, 0
      %p181 = por %p179, %p180
      %p182 = scmp.ne.s32.totalorder %s171, %s174
      %p183 = scmp.eq.s32.totalorder %s27, 33
      %p184 = por %p182, %p183
      %p185 = scmp.ne.s32.totalorder %s174, %s175
      %p186 = scmp.eq.s32.totalorder %s27, 0
      %p187 = por %p185, %p186
      %p188 = scmp.ne.s32.totalorder %s174, %s175
      %p189 = scmp.eq.s32.totalorder %s28, 33
      %p190 = por %p188, %p189
      %p192 = scmp.ne.s32.totalorder %s175, %s191
      %p193 = scmp.eq.s32.totalorder %s28, 0
      %p194 = por %p192, %p193
      %s195 = smul.u32 %s29, 17
      %s196 = sadd.s32 %s195, %s30
      %s197 = sld [smem:[#allocation3 + %s196]]
      %s198 = smul.u32 %s48, 17
      %s199 = sadd.s32 %s198, %s44
      %s200 = sld [smem:[#allocation3 + %s199]]
      %s201 = ssub.s32 %s197, %s200
      %p202 = scmp.eq.s32.totalorder %s201, 0
      %s204 = sadd.s32 %s203, 1
      %s205 = scalar_select %p202, %s203, %s204
      %p208 = pneg %p202
      %p209 = scmp.eq.s32.totalorder %s22, 33
      %p210 = por %p208, %p209
      %p211 = scmp.ne.s32.totalorder %s203, %s206
      %p212 = scmp.eq.s32.totalorder %s22, 0
      %p213 = por %p211, %p212
      %p214 = scmp.ne.s32.totalorder %s203, %s206
      %p215 = scmp.eq.s32.totalorder %s27, 33
      %p216 = por %p214, %p215
      %p217 = scmp.ne.s32.totalorder %s206, %s207
      %p218 = scmp.eq.s32.totalorder %s27, 0
      %p219 = por %p217, %p218
      %p220 = scmp.ne.s32.totalorder %s206, %s207
      %p221 = scmp.eq.s32.totalorder %s28, 33
      %p222 = por %p220, %p221
      %p224 = scmp.ne.s32.totalorder %s207, %s223
      %p225 = scmp.eq.s32.totalorder %s28, 0
      %p226 = por %p224, %p225
      %s227 = ssub.s32 %s29, %s48
      %p228 = scmp.eq.s32.totalorder %s227, 0
      %s230 = sadd.s32 %s229, 1
      %s231 = scalar_select %p228, %s229, %s230
      %p234 = pneg %p228
      %p235 = scmp.eq.s32.totalorder %s22, 33
      %p236 = por %p234, %p235
      %p237 = scmp.ne.s32.totalorder %s229, %s232
      %p238 = scmp.eq.s32.totalorder %s22, 0
      %p239 = por %p237, %p238
      %p240 = scmp.ne.s32.totalorder %s229, %s232
      %p241 = scmp.eq.s32.totalorder %s27, 33
      %p242 = por %p240, %p241
      %p243 = scmp.ne.s32.totalorder %s232, %s233
      %p244 = scmp.eq.s32.totalorder %s27, 0
      %p245 = por %p243, %p244
      %p246 = scmp.ne.s32.totalorder %s232, %s233
      %p247 = scmp.eq.s32.totalorder %s28, 33
      %p248 = por %p246, %p247
      %p250 = scmp.ne.s32.totalorder %s233, %s249
      %p251 = scmp.eq.s32.totalorder %s28, 0
      %p252 = por %p250, %p251
      %s253 = ssub.s32 %s29, %s48
      %p254 = scmp.eq.s32.totalorder %s253, 0
      %s256 = sadd.s32 %s255, 1
      %s257 = scalar_select %p254, %s255, %s256
      %p260 = pneg %p254
      %p261 = scmp.eq.s32.totalorder %s22, 33
      %p262 = por %p260, %p261
      %p263 = scmp.ne.s32.totalorder %s255, %s258
      %p264 = scmp.eq.s32.totalorder %s22, 0
      %p265 = por %p263, %p264
      %p266 = scmp.ne.s32.totalorder %s255, %s258
      %p267 = scmp.eq.s32.totalorder %s27, 33
      %p268 = por %p266, %p267
      %p269 = scmp.ne.s32.totalorder %s258, %s259
      %p270 = scmp.eq.s32.totalorder %s27, 0
      %p271 = por %p269, %p270
      %p272 = scmp.ne.s32.totalorder %s258, %s259
      %p273 = scmp.eq.s32.totalorder %s28, 33
      %p274 = por %p272, %p273
      %p276 = scmp.ne.s32.totalorder %s259, %s275
      %p277 = scmp.eq.s32.totalorder %s28, 0
      %p278 = por %p276, %p277
      %p279 = scmp.le.s32.totalorder 1, %s22
      %p280 = scmp.lt.s32.totalorder %s22, 35
      %p281 = pnand %p279, %p280
      %p282 = pneg %p281
      // Predicated region
      $region9: #{tpu_custom_call.1} parent=5 // pred_check
        _
      $region10: #{tpu_custom_call.1} parent=5 // pred_check_branch
        %284 = sbr.rel (%p281) target = $region12
      $region11: #{tpu_custom_call.1} parent=5 // pred_region
        %s285 = ssub.s32 %s22, 1
      $region12: #{tpu_custom_call.1} parent=5 // pred_fallthru
        _
      %p286 = scmp.lt.s32.totalorder %s22, 34
      // Predicated region
      $region13: #{tpu_custom_call.1} parent=5 // pred_check
        %p287 = pneg %p286
      $region14: #{tpu_custom_call.1} parent=5 // pred_check_branch
        %289 = sbr.rel (%p287) target = $region16
      $region15: #{tpu_custom_call.1} parent=5 // pred_region
        // Predicated region
        $region17: #{tpu_custom_call.1} parent=15 // pred_check
          %p290 = pneg %p61
        $region18: #{tpu_custom_call.1} parent=15 // pred_check_branch
          %292 = sbr.rel (%p290) target = $region20
        $region19: #{tpu_custom_call.1} parent=15 // pred_region
          %p293 = scmp.lt.s32.totalorder %s29, 1
          %s294 = scalar_select %p293, %s29, 1
          %s295 = smul.addr %s294, 4
          %s296 = scalar_lea.vmem %s1, %s295
        $region20: #{tpu_custom_call.1} parent=15 // pred_fallthru
          _
        // Predicated region
        $region21: #{tpu_custom_call.1} parent=15 // pred_check
          %p297 = pneg %p101
        $region22: #{tpu_custom_call.1} parent=15 // pred_check_branch
          %299 = sbr.rel (%p297) target = $region24
        $region23: #{tpu_custom_call.1} parent=15 // pred_region
          %s300 = smul.u32 %s29, 17
          %s301 = sadd.s32 %s300, %s30
          %s302 = sld [smem:[#allocation3 + %s301]]
          %p303 = scmp.eq.s32.totalorder %s302, %s30
          %s304 = scalar_select %p303, 1, 0
          %s305 = smul.u32 %s304, %s31
          %s306 = smul.u32 2, %s305
          %p307 = scmp.lt.s32.totalorder %s302, 16
          %s308 = scalar_select %p307, %s302, 16
          %p309 = scmp.lt.s32.totalorder %s306, 1
          %s310 = scalar_select %p309, %s306, 1
          %s311 = smul.addr %s308, 16
          %s312 = sadd.s32 %s310, %s311
          %s313 = smul.addr %s312, 4
          %s314 = scalar_lea.vmem %s2, %s313
          %s315 = smul.u32 %s29, 17
          %s316 = sadd.s32 %s315, %s30
          %s317 = sld [smem:[#allocation3 + %s316]]
          %p318 = scmp.eq.s32.totalorder %s317, %s30
          %s319 = scalar_select %p318, 1, 0
          %s320 = smul.u32 %s319, %s31
          %s321 = smul.u32 2, %s320
        $region24: #{tpu_custom_call.1} parent=15 // pred_fallthru
          _
        // Predicated region
        $region25: #{tpu_custom_call.1} parent=15 // pred_check
          %p322 = pneg %p141
        $region26: #{tpu_custom_call.1} parent=15 // pred_check_branch
          %324 = sbr.rel (%p322) target = $region28
        $region27: #{tpu_custom_call.1} parent=15 // pred_region
          %s325 = smul.u32 %s29, 17
          %s326 = sadd.s32 %s325, %s30
          %s327 = sld [smem:[#allocation3 + %s326]]
          %p328 = scmp.eq.s32.totalorder %s327, %s30
          %s329 = scalar_select %p328, 1, 0
          %s330 = smul.u32 %s329, %s31
          %s331 = smul.u32 2, %s330
          %p332 = scmp.lt.s32.totalorder %s327, 16
          %s333 = scalar_select %p332, %s327, 16
          %p334 = scmp.lt.s32.totalorder %s331, 1
          %s335 = scalar_select %p334, %s331, 1
          %s336 = smul.addr %s333, 2
          %s337 = sadd.s32 %s335, %s336
          %s338 = scalar_lea.vmem %s3, %s337
          %s339 = smul.u32 %s29, 17
          %s340 = sadd.s32 %s339, %s30
          %s341 = sld [smem:[#allocation3 + %s340]]
          %p342 = scmp.eq.s32.totalorder %s341, %s30
          %s343 = scalar_select %p342, 1, 0
          %s344 = smul.u32 %s343, %s31
          %s345 = smul.u32 2, %s344
        $region28: #{tpu_custom_call.1} parent=15 // pred_fallthru
          _
        // Predicated region
        $region29: #{tpu_custom_call.1} parent=15 // pred_check
          %p346 = pneg %p181
        $region30: #{tpu_custom_call.1} parent=15 // pred_check_branch
          %348 = sbr.rel (%p346) target = $region32
        $region31: #{tpu_custom_call.1} parent=15 // pred_region
          %s349 = smul.u32 %s29, 17
          %s350 = sadd.s32 %s349, %s30
          %s351 = sld [smem:[#allocation3 + %s350]]
          %p352 = scmp.eq.s32.totalorder %s351, %s30
          %s353 = scalar_select %p352, 1, 0
          %s354 = smul.u32 %s353, %s31
          %s355 = smul.u32 32, %s354
          %p356 = scmp.lt.s32.totalorder %s351, 16
          %s357 = scalar_select %p356, %s351, 16
          %p358 = scmp.lt.s32.totalorder %s355, 31
          %s359 = scalar_select %p358, %s355, 31
          %s360 = smul.addr %s357, 32
          %s361 = sadd.s32 %s359, %s360
          %s362 = smul.addr %s361, 4
          %s363 = scalar_lea.vmem %s4, %s362
          %s364 = smul.u32 %s29, 17
          %s365 = sadd.s32 %s364, %s30
          %s366 = sld [smem:[#allocation3 + %s365]]
          %p367 = scmp.eq.s32.totalorder %s366, %s30
          %s368 = scalar_select %p367, 1, 0
          %s369 = smul.u32 %s368, %s31
          %s370 = smul.u32 32, %s369
        $region32: #{tpu_custom_call.1} parent=15 // pred_fallthru
          _
        // Predicated region
        $region33: #{tpu_custom_call.1} parent=15 // pred_check
          %p371 = pneg %p213
        $region34: #{tpu_custom_call.1} parent=15 // pred_check_branch
          %373 = sbr.rel (%p371) target = $region36
        $region35: #{tpu_custom_call.1} parent=15 // pred_region
          %s374 = smul.u32 %s29, 17
          %s375 = sadd.s32 %s374, %s30
          %s376 = sld [smem:[#allocation3 + %s375]]
          %p377 = scmp.lt.s32.totalorder %s376, 16
          %s378 = scalar_select %p377, %s376, 16
          %s379 = scalar_lea.vmem %s5, %s378
          %s380 = smul.u32 %s29, 17
          %s381 = sadd.s32 %s380, %s30
          %s382 = sld [smem:[#allocation3 + %s381]]
        $region36: #{tpu_custom_call.1} parent=15 // pred_fallthru
          _
        // Predicated region
        $region37: #{tpu_custom_call.1} parent=15 // pred_check
          %p383 = pneg %p239
        $region38: #{tpu_custom_call.1} parent=15 // pred_check_branch
          %385 = sbr.rel (%p383) target = $region40
        $region39: #{tpu_custom_call.1} parent=15 // pred_region
          %p386 = scmp.lt.s32.totalorder %s29, 1
          %s387 = scalar_select %p386, %s29, 1
          %s388 = smul.addr %s387, 8
          %s389 = scalar_lea.vmem %s6, %s388
        $region40: #{tpu_custom_call.1} parent=15 // pred_fallthru
          _
      $region16: #{tpu_custom_call.1} parent=5 // pred_fallthru
        _
      %p390 = scmp.le.s32.totalorder 1, %s22
      %p391 = scmp.lt.s32.totalorder %s22, 35
      %p392 = pnand %p390, %p391
      %p393 = pneg %p392
      // Predicated region
      $region41: #{tpu_custom_call.1} parent=5 // pred_check
        _
      $region42: #{tpu_custom_call.1} parent=5 // pred_check_branch
        %395 = sbr.rel (%p392) target = $region44
      $region43: #{tpu_custom_call.1} parent=5 // pred_region
        %s396 = ssub.s32 %s22, 1
        %p397 = scmp.lt.s32.totalorder %s32, 1
        %s398 = scalar_select %p397, %s32, 1
        %s399 = smul.addr %s398, 4
        %s400 = scalar_lea.vmem %s1, %s399
        %p401 = pneg %p67
        %p402 = pneg %p64
        %s403 = smul.u32 %s32, 17
        %s404 = sadd.s32 %s403, %s33
        %s405 = sld [smem:[#allocation3 + %s404]]
        %p406 = scmp.eq.s32.totalorder %s405, %s33
        %s407 = scalar_select %p406, 1, 0
        %s408 = smul.u32 %s407, %s34
        %s409 = smul.u32 2, %s408
        %p410 = scmp.lt.s32.totalorder %s405, 16
        %s411 = scalar_select %p410, %s405, 16
        %p412 = scmp.lt.s32.totalorder %s409, 1
        %s413 = scalar_select %p412, %s409, 1
        %s414 = smul.addr %s411, 16
        %s415 = sadd.s32 %s413, %s414
        %s416 = smul.addr %s415, 4
        %s417 = scalar_lea.vmem %s2, %s416
        %p418 = pneg %p107
        %p419 = pneg %p104
        %s420 = smul.u32 %s32, 17
        %s421 = sadd.s32 %s420, %s33
        %s422 = sld [smem:[#allocation3 + %s421]]
        %p423 = scmp.eq.s32.totalorder %s422, %s33
        %s424 = scalar_select %p423, 1, 0
        %s425 = smul.u32 %s424, %s34
        %s426 = smul.u32 2, %s425
        %p427 = scmp.lt.s32.totalorder %s422, 16
        %s428 = scalar_select %p427, %s422, 16
        %p429 = scmp.lt.s32.totalorder %s426, 1
        %s430 = scalar_select %p429, %s426, 1
        %s431 = smul.addr %s428, 2
        %s432 = sadd.s32 %s430, %s431
        %s433 = scalar_lea.vmem %s3, %s432
        %p434 = pneg %p147
        %p435 = pneg %p144
        %s436 = smul.u32 %s32, 17
        %s437 = sadd.s32 %s436, %s33
        %s438 = sld [smem:[#allocation3 + %s437]]
        %p439 = scmp.eq.s32.totalorder %s438, %s33
        %s440 = scalar_select %p439, 1, 0
        %s441 = smul.u32 %s440, %s34
        %s442 = smul.u32 32, %s441
        %p443 = scmp.lt.s32.totalorder %s438, 16
        %s444 = scalar_select %p443, %s438, 16
        %p445 = scmp.lt.s32.totalorder %s442, 31
        %s446 = scalar_select %p445, %s442, 31
        %s447 = smul.addr %s444, 32
        %s448 = sadd.s32 %s446, %s447
        %s449 = smul.addr %s448, 4
        %s450 = scalar_lea.vmem %s4, %s449
        %p451 = pneg %p187
        %p452 = pneg %p184
        %s453 = smul.u32 %s32, 17
        %s454 = sadd.s32 %s453, %s33
        %s455 = sld [smem:[#allocation3 + %s454]]
        %p456 = scmp.lt.s32.totalorder %s455, 16
        %s457 = scalar_select %p456, %s455, 16
        %s458 = scalar_lea.vmem %s5, %s457
        %p459 = pneg %p219
        %p460 = pneg %p216
        %p461 = scmp.lt.s32.totalorder %s32, 1
        %s462 = scalar_select %p461, %s32, 1
        %s463 = smul.addr %s462, 8
        %s464 = scalar_lea.vmem %s6, %s463
        %p465 = pneg %p245
        %p466 = pneg %p242
        %p467 = pneg %p271
        %p468 = pneg %p268
        %s469 = sand.u32 %s258, 1
        %s470 = scalar_lea.sflag [#allocation5], %s469
        %s471 = sand.u32 %s258, 1
        %s472 = smul.addr %s471, 8
        %s473 = scalar_lea.vmem [#allocation4], %s472
        %p474 = scmp.lt.s32.totalorder %s32, 1
        %s475 = scalar_select %p474, %s32, 1
        %s476 = smul.addr %s475, 4
        %s477 = scalar_lea.vmem %s1, %s476
        %s478 = smul.u32 %s32, 17
        %s479 = sadd.s32 %s478, %s33
        %s480 = sld [smem:[#allocation3 + %s479]]
        %p481 = scmp.eq.s32.totalorder %s480, %s33
        %s482 = scalar_select %p481, 1, 0
        %s483 = smul.u32 %s482, %s34
        %s484 = smul.u32 2, %s483
        %p485 = scmp.lt.s32.totalorder %s480, 16
        %s486 = scalar_select %p485, %s480, 16
        %p487 = scmp.lt.s32.totalorder %s484, 1
        %s488 = scalar_select %p487, %s484, 1
        %s489 = smul.addr %s486, 16
        %s490 = sadd.s32 %s488, %s489
        %s491 = smul.addr %s490, 4
        %s492 = scalar_lea.vmem %s2, %s491
        %s493 = smul.u32 %s32, 17
        %s494 = sadd.s32 %s493, %s33
        %s495 = sld [smem:[#allocation3 + %s494]]
        %p496 = scmp.eq.s32.totalorder %s495, %s33
        %s497 = scalar_select %p496, 1, 0
        %s498 = smul.u32 %s497, %s34
        %s499 = smul.u32 2, %s498
        %s500 = smul.u32 %s32, 17
        %s501 = sadd.s32 %s500, %s33
        %s502 = sld [smem:[#allocation3 + %s501]]
        %p503 = scmp.eq.s32.totalorder %s502, %s33
        %s504 = scalar_select %p503, 1, 0
        %s505 = smul.u32 %s504, %s34
        %s506 = smul.u32 2, %s505
        %p507 = scmp.lt.s32.totalorder %s502, 16
        %s508 = scalar_select %p507, %s502, 16
        %p509 = scmp.lt.s32.totalorder %s506, 1
        %s510 = scalar_select %p509, %s506, 1
        %s511 = smul.addr %s508, 2
        %s512 = sadd.s32 %s510, %s511
        %s513 = scalar_lea.vmem %s3, %s512
        %s514 = smul.u32 %s32, 17
        %s515 = sadd.s32 %s514, %s33
        %s516 = sld [smem:[#allocation3 + %s515]]
        %p517 = scmp.eq.s32.totalorder %s516, %s33
        %s518 = scalar_select %p517, 1, 0
        %s519 = smul.u32 %s518, %s34
        %s520 = smul.u32 2, %s519
        %s521 = smul.u32 %s32, 17
        %s522 = sadd.s32 %s521, %s33
        %s523 = sld [smem:[#allocation3 + %s522]]
        %p524 = scmp.eq.s32.totalorder %s523, %s33
        %s525 = scalar_select %p524, 1, 0
        %s526 = smul.u32 %s525, %s34
        %s527 = smul.u32 32, %s526
        %p528 = scmp.lt.s32.totalorder %s523, 16
        %s529 = scalar_select %p528, %s523, 16
        %p530 = scmp.lt.s32.totalorder %s527, 31
        %s531 = scalar_select %p530, %s527, 31
        %s532 = smul.addr %s529, 32
        %s533 = sadd.s32 %s531, %s532
        %s534 = smul.addr %s533, 4
        %s535 = scalar_lea.vmem %s4, %s534
        %s536 = smul.u32 %s32, 17
        %s537 = sadd.s32 %s536, %s33
        %s538 = sld [smem:[#allocation3 + %s537]]
        %p539 = scmp.eq.s32.totalorder %s538, %s33
        %s540 = scalar_select %p539, 1, 0
        %s541 = smul.u32 %s540, %s34
        %s542 = smul.u32 32, %s541
        %s543 = smul.u32 %s32, 17
        %s544 = sadd.s32 %s543, %s33
        %s545 = sld [smem:[#allocation3 + %s544]]
        %p546 = scmp.lt.s32.totalorder %s545, 16
        %s547 = scalar_select %p546, %s545, 16
        %s548 = scalar_lea.vmem %s5, %s547
        %s549 = smul.u32 %s32, 17
        %s550 = sadd.s32 %s549, %s33
        %s551 = sld [smem:[#allocation3 + %s550]]
        %p552 = scmp.lt.s32.totalorder %s32, 1
        %s553 = scalar_select %p552, %s32, 1
        %s554 = smul.addr %s553, 8
        %s555 = scalar_lea.vmem %s6, %s554
        %p557 = scmp.eq.s32.totalorder %s33, 0
        %p558 = scmp.eq.s32.totalorder %s34, 0
        %p559 = pnand %p557, %p558
        %p560 = pneg %p559
        // Predicated region
        $region45: #{tpu_custom_call.1} parent=43 // pred_check
          _
        $region46: #{tpu_custom_call.1} parent=43 // pred_check_branch
          %562 = sbr.rel (%p559) target = $region48
        $region47: #{tpu_custom_call.1} parent=43 // pred_region
          %vm563 = vcmask 523264
          %564 = vst.msk [vmem:[%s473] sm:$0xff] %vm563, 0.0
        $region48: #{tpu_custom_call.1} parent=43 // pred_fallthru
          _
        %s565 = smul.u32 %s32, 17
        %s566 = sadd.s32 %s565, %s33
        %s567 = sld [smem:[#allocation3 + %s566]]
        %p568 = scmp.eq.s32.totalorder %s567, %s33
        // Predicated region
        $region49: #{tpu_custom_call.1} parent=43 // pred_check
          %p569 = pneg %p568
        $region50: #{tpu_custom_call.1} parent=43 // pred_check_branch
          %571 = sbr.rel (%p569) target = $region52
        $region51: #{tpu_custom_call.1} parent=43 // pred_region
          %v572 = vld [vmem:[%s477] sm:$0xf]
          %v573 = vld [vmem:[%s492] sm:$0xff]
          %v574 = vld [vmem:[%s492 + $0x8] sm:$0xff]
          %v575 = vld [vmem:[%s492 + $0x10] sm:$0xff]
          %v576 = vld [vmem:[%s492 + $0x18] sm:$0xff]
          %v577 = vld [vmem:[%s492 + $0x20] sm:$0xff]
          %v578 = vld [vmem:[%s492 + $0x28] sm:$0xff]
          %v579 = vld [vmem:[%s492 + $0x30] sm:$0xff]
          %v580 = vld [vmem:[%s492 + $0x38] sm:$0xff]
          %v581 = vld [vmem:[%s513] sm:$0x3]
          %v583 = vlaneseq
          %v584 = vshrl.u32 %v583, 7
          %v585 = vsub.s32 0, %v584
          %v586 = vrot.slane %v581, %v585
          %v587 = vlaneseq
          %v588 = vshrl.u32 %v587, 7
          %v589 = vsub.s32 1, %v588
          %v590 = vrot.slane %v581, %v589
          %v601 = vunpack.c.l.b16 %v573
          %v602 = vunpack.c.h.b16 %v573
          %v603 = vunpack.c.l.b16 %v574
          %v604 = vunpack.c.h.b16 %v574
          %v605 = vunpack.c.l.b16 %v575
          %v606 = vunpack.c.h.b16 %v575
          %v607 = vunpack.c.l.b16 %v576
          %v608 = vunpack.c.h.b16 %v576
          %v609 = vunpack.c.l.b16 %v577
          %v610 = vunpack.c.h.b16 %v577
          %v611 = vunpack.c.l.b16 %v578
          %v612 = vunpack.c.h.b16 %v578
          %v613 = vunpack.c.l.b16 %v579
          %v614 = vunpack.c.h.b16 %v579
          %v615 = vunpack.c.l.b16 %v580
          %v616 = vunpack.c.h.b16 %v580
          %v617 = vpack.c.b16 %v603, %v601
          %v618 = vpack.c.b16 %v604, %v602
          %v619 = vpack.c.b16 %v607, %v605
          %v620 = vpack.c.b16 %v608, %v606
          %v621 = vpack.c.b16 %v611, %v609
          %v622 = vpack.c.b16 %v612, %v610
          %v623 = vpack.c.b16 %v615, %v613
          %v624 = vpack.c.b16 %v616, %v614
          %vm633 = vcmask 523264
          %v635 = vsel %vm633, %v572, 0
          %637 = vmatprep.subr.bf16.mxu0 0
          %638 = vmatpush1.bf16.msra.mxu0 0
          %639 = vmatprep.subr.bf16.mxu0 0
          %640 = vmatpush1.bf16.msra.mxu0 0
          %641 = vmatprep.subr.bf16.mxu0 0
          %642 = vmatpush1.bf16.msra.mxu0 0
          %643 = vmatprep.subr.bf16.mxu0 0
          %644 = vmatpush1.bf16.msra.mxu0 0
          %645 = vmatprep.subr.bf16.mxu0 %v624
          %646 = vmatpush1.bf16.msra.mxu0 %v623
          %647 = vmatprep.subr.bf16.mxu0 %v622
          %648 = vmatpush1.bf16.msra.mxu0 %v621
          %649 = vmatprep.subr.bf16.mxu0 %v620
          %650 = vmatpush1.bf16.msra.mxu0 %v619
          %651 = vmatprep.subr.bf16.mxu0 %v618
          %652 = vmatpush1.bf16.msra.mxu0 %v617
          %653 = vmatprep.subr.bf16.mxu0 0
          %654 = vmatpush2.bf16.msra.mxu0 0
          %655 = vmatprep.subr.bf16.mxu0 0
          %656 = vmatpush2.bf16.msra.mxu0 0
          %657 = vmatprep.subr.bf16.mxu0 0
          %658 = vmatpush2.bf16.msra.mxu0 0
          %659 = vmatprep.subr.bf16.mxu0 0
          %660 = vmatpush2.bf16.msra.mxu0 0
          %661 = vmatprep.subr.bf16.mxu0 0
          %662 = vmatpush2.bf16.msra.mxu0 0
          %663 = vmatprep.subr.bf16.mxu0 0
          %664 = vmatpush2.bf16.msra.mxu0 0
          %665 = vmatprep.subr.bf16.mxu0 0
          %666 = vmatpush2.bf16.msra.mxu0 0
          %667 = vmatprep.subr.bf16.mxu0 0
          %668 = vmatpush2.bf16.msra.mxu0 0
          %669 = vmatprep.mubr.bf16.mxu0 0
          %670 = vmatmul.mubr.bf16.gmra.mxu0 %v635
          %v671 = vpop.f32.mrf.mxu0
          %v672 = vadd.f32 %v586, %v671
          %v673 = vpop.f32.mrf.mxu0
          %v674 = vadd.f32 %v590, %v673
          %v675 = vpop.f32.mrf.mxu0
          %v676 = vpop.f32.mrf.mxu0
          %677 = vdwg.mxu0
          %v678 = vmul.f32 %v672, 0.5
          %v679 = vmul.f32 %v674, 0.5
          %v680 = vrcp.pop 1.4142135
          %v681 = vmul.f32 %v672, %v680
          %v682 = vmul.f32 %v674, %v680
          %v683 = verf.f32.pop %v681
          %v684 = verf.f32.pop %v682
          %v685 = vadd.f32 %v683, 1.0
          %v686 = vadd.f32 %v684, 1.0
          %v687 = vmul.f32 %v678, %v685
          %v688 = vmul.f32 %v679, %v686
          %v689 = vpack.c.bf16 %v687, %v687
          %v690 = vpack.c.bf16 %v688, %v688
          %v691 = vld [vmem:[%s535] sm:$0xf]
          %v692 = vld [vmem:[%s535 + $0x4] sm:$0xf]
          %v693 = vld [vmem:[%s535 + $0x8] sm:$0xf]
          %v694 = vld [vmem:[%s535 + $0xc] sm:$0xf]
          %v695 = vld [vmem:[%s535 + $0x10] sm:$0xf]
          %v696 = vld [vmem:[%s535 + $0x14] sm:$0xf]
          %v697 = vld [vmem:[%s535 + $0x18] sm:$0xf]
          %v698 = vld [vmem:[%s535 + $0x1c] sm:$0xf]
          %v699 = vld [vmem:[%s535 + $0x20] sm:$0xf]
          %v700 = vld [vmem:[%s535 + $0x24] sm:$0xf]
          %v701 = vld [vmem:[%s535 + $0x28] sm:$0xf]
          %v702 = vld [vmem:[%s535 + $0x2c] sm:$0xf]
          %v703 = vld [vmem:[%s535 + $0x30] sm:$0xf]
          %v704 = vld [vmem:[%s535 + $0x34] sm:$0xf]
          %v705 = vld [vmem:[%s535 + $0x38] sm:$0xf]
          %v706 = vld [vmem:[%s535 + $0x3c] sm:$0xf]
          %v707 = vld [vmem:[%s535 + $0x40] sm:$0xf]
          %v708 = vld [vmem:[%s535 + $0x44] sm:$0xf]
          %v709 = vld [vmem:[%s535 + $0x48] sm:$0xf]
          %v710 = vld [vmem:[%s535 + $0x4c] sm:$0xf]
          %v711 = vld [vmem:[%s535 + $0x50] sm:$0xf]
          %v712 = vld [vmem:[%s535 + $0x54] sm:$0xf]
          %v713 = vld [vmem:[%s535 + $0x58] sm:$0xf]
          %v714 = vld [vmem:[%s535 + $0x5c] sm:$0xf]
          %v715 = vld [vmem:[%s535 + $0x60] sm:$0xf]
          %v716 = vld [vmem:[%s535 + $0x64] sm:$0xf]
          %v717 = vld [vmem:[%s535 + $0x68] sm:$0xf]
          %v718 = vld [vmem:[%s535 + $0x6c] sm:$0xf]
          %v719 = vld [vmem:[%s535 + $0x70] sm:$0xf]
          %v720 = vld [vmem:[%s535 + $0x74] sm:$0xf]
          %v721 = vld [vmem:[%s535 + $0x78] sm:$0xf]
          %v722 = vld [vmem:[%s535 + $0x7c] sm:$0xf]
          %v755 = vunpack.c.l.b16 %v691
          %v756 = vunpack.c.l.b16 %v692
          %v757 = vunpack.c.l.b16 %v693
          %v758 = vunpack.c.l.b16 %v694
          %v759 = vunpack.c.l.b16 %v695
          %v760 = vunpack.c.l.b16 %v696
          %v761 = vunpack.c.l.b16 %v697
          %v762 = vunpack.c.l.b16 %v698
          %v763 = vunpack.c.l.b16 %v699
          %v764 = vunpack.c.l.b16 %v700
          %v765 = vunpack.c.l.b16 %v701
          %v766 = vunpack.c.l.b16 %v702
          %v767 = vunpack.c.l.b16 %v703
          %v768 = vunpack.c.l.b16 %v704
          %v769 = vunpack.c.l.b16 %v705
          %v770 = vunpack.c.l.b16 %v706
          %v771 = vunpack.c.l.b16 %v707
          %v772 = vunpack.c.l.b16 %v708
          %v773 = vunpack.c.l.b16 %v709
          %v774 = vunpack.c.l.b16 %v710
          %v775 = vunpack.c.l.b16 %v711
          %v776 = vunpack.c.l.b16 %v712
          %v777 = vunpack.c.l.b16 %v713
          %v778 = vunpack.c.l.b16 %v714
          %v779 = vunpack.c.l.b16 %v715
          %v780 = vunpack.c.l.b16 %v716
          %v781 = vunpack.c.l.b16 %v717
          %v782 = vunpack.c.l.b16 %v718
          %v783 = vunpack.c.l.b16 %v719
          %v784 = vunpack.c.l.b16 %v720
          %v785 = vunpack.c.l.b16 %v721
          %v786 = vunpack.c.l.b16 %v722
          %v787 = vpack.c.b16 %v756, %v755
          %v788 = vpack.c.b16 %v758, %v757
          %v789 = vpack.c.b16 %v760, %v759
          %v790 = vpack.c.b16 %v762, %v761
          %v791 = vpack.c.b16 %v764, %v763
          %v792 = vpack.c.b16 %v766, %v765
          %v793 = vpack.c.b16 %v768, %v767
          %v794 = vpack.c.b16 %v770, %v769
          %v795 = vpack.c.b16 %v772, %v771
          %v796 = vpack.c.b16 %v774, %v773
          %v797 = vpack.c.b16 %v776, %v775
          %v798 = vpack.c.b16 %v778, %v777
          %v799 = vpack.c.b16 %v780, %v779
          %v800 = vpack.c.b16 %v782, %v781
          %v801 = vpack.c.b16 %v784, %v783
          %v802 = vpack.c.b16 %v786, %v785
          %819 = vmatprep.subr.bf16.mxu0 0
          %820 = vmatpush1.bf16.msra.mxu0 %v794
          %821 = vmatprep.subr.bf16.mxu0 0
          %822 = vmatpush1.bf16.msra.mxu0 %v793
          %823 = vmatprep.subr.bf16.mxu0 0
          %824 = vmatpush1.bf16.msra.mxu0 %v792
          %825 = vmatprep.subr.bf16.mxu0 0
          %826 = vmatpush1.bf16.msra.mxu0 %v791
          %827 = vmatprep.subr.bf16.mxu0 0
          %828 = vmatpush1.bf16.msra.mxu0 %v790
          %829 = vmatprep.subr.bf16.mxu0 0
          %830 = vmatpush1.bf16.msra.mxu0 %v789
          %831 = vmatprep.subr.bf16.mxu0 0
          %832 = vmatpush1.bf16.msra.mxu0 %v788
          %833 = vmatprep.subr.bf16.mxu0 0
          %834 = vmatpush1.bf16.msra.mxu0 %v787
          %835 = vmatprep.subr.bf16.mxu0 0
          %836 = vmatpush2.bf16.msra.mxu0 %v802
          %837 = vmatprep.subr.bf16.mxu0 0
          %838 = vmatpush2.bf16.msra.mxu0 %v801
          %839 = vmatprep.subr.bf16.mxu0 0
          %840 = vmatpush2.bf16.msra.mxu0 %v800
          %841 = vmatprep.subr.bf16.mxu0 0
          %842 = vmatpush2.bf16.msra.mxu0 %v799
          %843 = vmatprep.subr.bf16.mxu0 0
          %844 = vmatpush2.bf16.msra.mxu0 %v798
          %845 = vmatprep.subr.bf16.mxu0 0
          %846 = vmatpush2.bf16.msra.mxu0 %v797
          %847 = vmatprep.subr.bf16.mxu0 0
          %848 = vmatpush2.bf16.msra.mxu0 %v796
          %849 = vmatprep.subr.bf16.mxu0 0
          %850 = vmatpush2.bf16.msra.mxu0 %v795
          %851 = vmatprep.mubr.bf16.mxu0 %v690
          %852 = vmatmul.mubr.bf16.gmra.mxu0 %v689
          %v853 = vpop.f32.mrf.mxu0
          %v854 = vadd.f32 0.0, %v853
          %v855 = vpop.f32.mrf.mxu0
          %v856 = vpop.f32.mrf.mxu0
          %v857 = vpop.f32.mrf.mxu0
          %858 = vdwg.mxu0
          %v859 = vlaneseq
          %v860 = vand.u32 %v859, 127
          %v861 = vstv %s33
          %vm862 = vcmp.eq.s32.totalorder %v860, %v861
          %v863 = vld [vmem:[%s555] sm:$0xff]
          %v864 = vsel %vm862, 1, 0
          %v865 = vcvt.s32.f32 %v864
          %v866 = vmul.f32 %v863, %v865
          %vm867 = vcmask 138240
          %v868 = vsel %vm867, %v866, 0.0
          %869 = vadd.xlane.f32.xlu0 %v868
          %v870 = vpop.xlane.xlu0 %869
          // Predicated region
          $region53: #{tpu_custom_call.1} parent=51 // pred_check
            %p871 = pneg %p558
          $region54: #{tpu_custom_call.1} parent=51 // pred_check_branch
            %873 = sbr.rel (%p871) target = $region56
          $region55: #{tpu_custom_call.1} parent=51 // pred_region
            %v874 = vld [vmem:[%s473] sm:$0xff]
            %v875 = vld [vmem:[%s548] sm:$0x1]
            %v877 = vlaneseq
            %v878 = vshrl.u32 %v877, 7
            %v879 = vsub.s32 0, %v878
            %v880 = vrot.slane %v875, %v879
            %v882 = vadd.f32 %v854, %v880
            %v883 = vmul.f32 %v870, %v882
            %v884 = vadd.f32 %v874, %v883
            %885 = vst.msk [vmem:[%s473] sm:$0xff] %vm633, %v884
          $region56: #{tpu_custom_call.1} parent=51 // pred_fallthru
            _
          %p886 = scmp.gt.s32.totalorder %s34, 0
          // Predicated region
          $region57: #{tpu_custom_call.1} parent=51 // pred_check
            %p887 = pneg %p886
          $region58: #{tpu_custom_call.1} parent=51 // pred_check_branch
            %889 = sbr.rel (%p887) target = $region60
          $region59: #{tpu_custom_call.1} parent=51 // pred_region
            %v890 = vld [vmem:[%s473] sm:$0xff]
            %v891 = vmul.f32 %v870, %v854
            %v892 = vadd.f32 %v890, %v891
            %893 = vst.msk [vmem:[%s473] sm:$0xff] %vm633, %v892
          $region60: #{tpu_custom_call.1} parent=51 // pred_fallthru
            _
        $region52: #{tpu_custom_call.1} parent=43 // pred_fallthru
          _
        %p894 = scmp.eq.s32.totalorder %s33, 16
        %p895 = pnand %p894, %p558
        %p896 = pneg %p895
        // Predicated region
        $region61: #{tpu_custom_call.1} parent=43 // pred_check
          _
        $region62: #{tpu_custom_call.1} parent=43 // pred_check_branch
          %898 = sbr.rel (%p895) target = $region64
        $region63: #{tpu_custom_call.1} parent=43 // pred_region
          %v899 = vld [vmem:[%s473] sm:$0xff]
          %v900 = vmul.f32 %v899, 0.1
          %v901 = vand.u32 2147483647, %v900
          %vm902 = vcmask 523264
          %v903 = vsel %vm902, %v901, -inf
          %904 = vmax.xlane.f32.xlu0 %v903
          %v905 = vpop.xlane.xlu0 %904
          %v906 = vadd.f32 %v905, 1e-06
          %v907 = vrcp.pop %v906
          %v908 = vmul.f32 %v900, %v907
          %909 = vst.msk [vmem:[%s473] sm:$0xff] %vm902, %v908
        $region64: #{tpu_custom_call.1} parent=43 // pred_fallthru
          _
        %s910 = sand.u32 %s258, 1
        %s911 = scalar_lea.sflag [#allocation5], %s910
        %s912 = sand.u32 %s258, 1
        %s913 = smul.addr %s912, 8
        %s914 = scalar_lea.vmem [#allocation4], %s913
        // Predicated region
        $region65: #{tpu_custom_call.1} parent=43 // pred_check
          %p915 = pneg %p268
        $region66: #{tpu_custom_call.1} parent=43 // pred_check_branch
          %917 = sbr.rel (%p915) target = $region68
        $region67: #{tpu_custom_call.1} parent=43 // pred_region
          %s919 = ssub.s32 128, 128
          %920 = vsyncadd %s911, %s919
          %s921 = smul.addr %s32, 128
          %s922 = scalar_lea.hbm %s7, %s921
          %s924 = sshll.u32 %s914, 4
          %s925 = int_to_ptr.vmem [resolvable:$true] %s924
          %927 = dma.vmem_to_hbm [thread:$0]  %s925, 128, %s922, %s911
        $region68: #{tpu_custom_call.1} parent=43 // pred_fallthru
          _
      $region44: #{tpu_custom_call.1} parent=5 // pred_fallthru
        _
      %p928 = scmp.le.s32.totalorder 2, %s22
      // Predicated region
      $region69: #{tpu_custom_call.1} parent=5 // pred_check
        %p929 = pneg %p928
      $region70: #{tpu_custom_call.1} parent=5 // pred_check_branch
        %931 = sbr.rel (%p929) target = $region72
      $region71: #{tpu_custom_call.1} parent=5 // pred_region
        %s932 = ssub.s32 %s22, 2
        // Predicated region
        $region73: #{tpu_custom_call.1} parent=71 // pred_check
          %p933 = pneg %p274
        $region74: #{tpu_custom_call.1} parent=71 // pred_check_branch
          %935 = sbr.rel (%p933) target = $region76
        $region75: #{tpu_custom_call.1} parent=71 // pred_region
          %s936 = sand.u32 %s259, 1
          %s937 = scalar_lea.sflag [#allocation5], %s936
          %s938 = sand.u32 %s259, 1
          %s939 = smul.addr %s938, 8
          %s940 = scalar_lea.vmem [#allocation4], %s939
          %941 = dma.done %s937, 128
        $region76: #{tpu_custom_call.1} parent=71 // pred_fallthru
          _
      $region72: #{tpu_custom_call.1} parent=5 // pred_fallthru
        _
    $region6: #{tpu_custom_call.1} parent=1 // loop_footer
      %s26 = sadd.s32 1, %s22
    $region7: #{tpu_custom_call.1} parent=1 // loop_footer_branch
      %21 = sbr.rel target = $region3
    $region8: #{tpu_custom_call.1} parent=1 // loop_exit
      _
    %942 = vsyncpa [#allocation5], 1
    %s943 = scalar_lea.sflag [#allocation5], 1
    %944 = vsyncpa %s943, 1

</llo_original>
